<compile_context>
chip_gen: v7x
topology: tpu7x:2x2x1
jax: 0.10.0
libtpu: 0.0.40
codegen_flags: <defaults>
</compile_context>

<pallas_src>
import jax
import jax.numpy as jnp
from jax import lax
from jax.experimental import pallas as pl
from jax.experimental.pallas import tpu as pltpu


def _embedding_net_kernel(x_ref, w1_ref, b1_ref, w2_ref, b2_ref,
                          emb_ref, outz_ref):
    # Operands in caller dtype (bf16-native MXU when inputs are bf16);
    # accumulate in f32.
    h = jnp.dot(x_ref[...], w1_ref[...], preferred_element_type=jnp.float32)
    h = h + b1_ref[...].astype(jnp.float32)
    h = jnp.maximum(h, 0.0)                                   # ReLU
    emb_ref[...] = h.astype(emb_ref.dtype)

    # Second matmul: feed MXU in the weight dtype (no-op cast when f32).
    z = jnp.dot(h.astype(w2_ref.dtype), w2_ref[...],
                preferred_element_type=jnp.float32)
    z = z + b2_ref[...].astype(jnp.float32)

    # F.normalize(z, p=2, dim=1): z / max(||z||, 1e-12)
    #   == z * rsqrt(max(sum(z^2), 1e-24)).  rsqrt runs on the EUP (free slot).
    sumsq = jnp.sum(z * z, axis=-1, keepdims=True)
    inv_norm = lax.rsqrt(jnp.maximum(sumsq, 1e-24))
    outz_ref[...] = (z * inv_norm).astype(outz_ref.dtype)


def _round_up(x, m):
    return (x + m - 1) // m * m


def _pad2d(a, rows, cols):
    if a.shape == (rows, cols):
        return a
    return jnp.zeros((rows, cols), a.dtype).at[:a.shape[0], :a.shape[1]].set(a)


def embedding_net_forward(features, w1, b1, w2, b2, *,
                          block_rows=None, vmem_limit_bytes=None):
    """features: (B, resSize); w1: (embedSize, resSize); b1: (embedSize,);
    w2: (outzSize, embedSize); b2: (outzSize,)  [PyTorch nn.Linear layout].
    Returns (embedding (B, embedSize), out_z (B, outzSize))."""
    B, res = features.shape
    emb_dim, res2 = w1.shape
    out_dim, emb_dim2 = w2.shape
    assert res == res2 and emb_dim == emb_dim2

    dtype = features.dtype
    itemsize = jnp.dtype(dtype).itemsize

    # Lane-pad small output-feature dims to 128 (zeros -> results unchanged;
    # padded embedding columns are relu(0)=0 and padded z columns are 0).
    emb_p = 128 if emb_dim < 128 else emb_dim
    out_p = 128 if out_dim < 128 else out_dim

    # One-off layout prep: (out,in)->(in,out), biases as (1,N) rows, weights
    # stored once in the activation dtype (bf16 path when activations are bf16).
    w1t = _pad2d(w1.T.astype(dtype), res, emb_p)
    b1r = _pad2d(b1.reshape(1, emb_dim).astype(dtype), 1, emb_p)
    w2t = _pad2d(w2.T.astype(dtype), emb_p, out_p)
    b2r = _pad2d(b2.reshape(1, out_dim).astype(dtype), 1, out_p)

    # --- VMEM-aware batch-tile selection ---------------------------------
    per_row = 2 * (res + emb_p + out_p) * itemsize          # double-buffered x + outputs
    weights_bytes = (res * emb_p + emb_p + emb_p * out_p + out_p) * itemsize  # Buffered(1)
    budget = 32 * 1024 * 1024                                # default scoped VMEM v6e/v7x
    avail = max(budget - weights_bytes, per_row * 8)
    vmem_cap = max(8, (avail // per_row) // 8 * 8)           # rows fitting budget (mult of 8)

    if block_rows is None:
        if B <= 256:
            block_rows = B if B <= vmem_cap else vmem_cap
        else:
            # >=2 grid steps so the "parallel" axis shards across v7x's 2 TCs,
            # while keeping tiles large (>=512 rows when possible).
            block_rows = min(vmem_cap, 1024, _round_up(pl.cdiv(B, 2), 8))
            block_rows = min(block_rows, B)

    if vmem_limit_bytes is None:
        need = (weights_bytes
                + per_row * block_rows                       # pipelined tiles
                + block_rows * (emb_p + out_p) * 4)          # f32 temporaries h / z
        vmem_limit_bytes = int(min(max(need * 5 // 4 + (4 << 20), 16 << 20),
                                   64 << 20))

    grid = (pl.cdiv(B, block_rows),)

    cost = pl.CostEstimate(
        flops=2 * B * (res * emb_p + emb_p * out_p),
        transcendentals=B,                                    # one rsqrt per row
        bytes_accessed=int((B * res + B * emb_p + B * out_p) * itemsize
                           + weights_bytes),
    )

    def _build(single_buffer_weights):
        kw = dict(pipeline_mode=pl.Buffered(1)) if single_buffer_weights else {}
        in_specs = [
            pl.BlockSpec((block_rows, res), lambda i: (i, 0)),        # x
            pl.BlockSpec((res, emb_p),      lambda i: (0, 0), **kw),  # W1^T (resident)
            pl.BlockSpec((1, emb_p),        lambda i: (0, 0), **kw),  # b1
            pl.BlockSpec((emb_p, out_p),    lambda i: (0, 0), **kw),  # W2^T (resident)
            pl.BlockSpec((1, out_p),        lambda i: (0, 0), **kw),  # b2
        ]
        out_specs = [
            pl.BlockSpec((block_rows, emb_p), lambda i: (i, 0)),      # embedding
            pl.BlockSpec((block_rows, out_p), lambda i: (i, 0)),      # out_z
        ]
        return pl.pallas_call(
            _embedding_net_kernel,
            out_shape=(jax.ShapeDtypeStruct((B, emb_p), dtype),
                       jax.ShapeDtypeStruct((B, out_p), dtype)),
            grid_spec=pltpu.PrefetchScalarGridSpec(
                num_scalar_prefetch=0, grid=grid,
                in_specs=in_specs, out_specs=out_specs),
            compiler_params=pltpu.CompilerParams(
                dimension_semantics=("parallel",),
                vmem_limit_bytes=vmem_limit_bytes),
            cost_estimate=cost,
        )

    try:
        emb_pad, z_pad = _build(True)(features, w1t, b1r, w2t, b2r)
    except Exception:
        # Fallback for Pallas versions without pipeline_mode=Buffered support.
        emb_pad, z_pad = _build(False)(features, w1t, b1r, w2t, b2r)

    embedding = emb_pad[:, :emb_dim] if emb_p != emb_dim else emb_pad
    out_z = z_pad[:, :out_dim] if out_p != out_dim else z_pad
    return embedding, out_z


if __name__ == "__main__":
    key = jax.random.PRNGKey(0)
    k_x, k_w1, k_w2 = jax.random.split(key, 3)

    # Small shapes consistent with Embedding_Net: (batch, resSize) input.
    B, resSize, embedSize, outzSize = 8, 64, 32, 16

    features = jax.random.normal(k_x, (B, resSize), dtype=jnp.float32)

    # weights_init: Linear.weight ~ N(0, 0.02), bias = 0.
    w1 = 0.02 * jax.random.normal(k_w1, (embedSize, resSize), dtype=jnp.float32)
    b1 = jnp.zeros((embedSize,), dtype=jnp.float32)
    w2 = 0.02 * jax.random.normal(k_w2, (outzSize, embedSize), dtype=jnp.float32)
    b2 = jnp.zeros((outzSize,), dtype=jnp.float32)

    # --- f32 path (exact vs reference) ---
    emb, out_z = embedding_net_forward(features, w1, b1, w2, b2)
    jax.block_until_ready((emb, out_z))

    emb_ref = jnp.maximum(features @ w1.T + b1, 0.0)
    z_ref = emb_ref @ w2.T + b2
    nrm = jnp.sqrt(jnp.sum(z_ref * z_ref, axis=1, keepdims=True))
    out_z_ref = z_ref / jnp.maximum(nrm, 1e-12)

    assert emb.shape == (B, embedSize) and out_z.shape == (B, outzSize)
    assert jnp.allclose(emb, emb_ref, atol=1e-5, rtol=1e-5), "embedding mismatch"
    assert jnp.allclose(out_z, out_z_ref, atol=1e-5, rtol=1e-5), "out_z mismatch"

    # --- bf16 activation path (MXU-native), looser tolerance vs f32 reference ---
    emb_bf, out_z_bf = embedding_net_forward(
        features.astype(jnp.bfloat16), w1, b1, w2, b2)
    jax.block_until_ready((emb_bf, out_z_bf))
    assert jnp.allclose(emb_bf.astype(jnp.float32), emb_ref, atol=3e-2, rtol=3e-2), \
        "bf16 embedding mismatch"
    assert jnp.allclose(out_z_bf.astype(jnp.float32), out_z_ref, atol=3e-2, rtol=3e-2), \
        "bf16 out_z mismatch"

    print("KERNEL_OK")
</pallas_src>

<mosaic_0001>
module attributes {stable_mosaic.version = 11 : i64} {
  func.func @_embedding_net_kernel(%arg0: i32, %arg1: memref<8x64xf32, #tpu.memory_space<vmem>>, %arg2: memref<64x128xf32, #tpu.memory_space<vmem>>, %arg3: memref<1x128xf32, #tpu.memory_space<vmem>>, %arg4: memref<128x128xf32, #tpu.memory_space<vmem>>, %arg5: memref<1x128xf32, #tpu.memory_space<vmem>>, %arg6: memref<8x128xf32, #tpu.memory_space<vmem>>, %arg7: memref<8x128xf32, #tpu.memory_space<vmem>>) attributes {dimension_semantics = [#tpu.dimension_semantics<parallel>], iteration_bounds = array<i64: 1>, scalar_prefetch = 0 : i64, scratch_operands = 0 : i64, tpu.core_type = #tpu.core_type<tc>, window_params = [{transform_indices = @transform_0, window_bounds = array<i64: 8, 64>}, {pipeline_mode = #tpu.pipeline_mode<synchronous>, transform_indices = @transform_1, window_bounds = array<i64: 64, 128>}, {pipeline_mode = #tpu.pipeline_mode<synchronous>, transform_indices = @transform_2, window_bounds = array<i64: 1, 128>}, {pipeline_mode = #tpu.pipeline_mode<synchronous>, transform_indices = @transform_3, window_bounds = array<i64: 128, 128>}, {pipeline_mode = #tpu.pipeline_mode<synchronous>, transform_indices = @transform_4, window_bounds = array<i64: 1, 128>}, {transform_indices = @transform_5, window_bounds = array<i64: 8, 128>}, {transform_indices = @transform_6, window_bounds = array<i64: 8, 128>}]} {
    %c0 = arith.constant 0 : index
    %c0_0 = arith.constant 0 : index
    %0 = vector.load %arg1[%c0, %c0_0] : memref<8x64xf32, #tpu.memory_space<vmem>>, vector<8x64xf32>
    %c0_1 = arith.constant 0 : index
    %c0_2 = arith.constant 0 : index
    %1 = vector.load %arg2[%c0_1, %c0_2] : memref<64x128xf32, #tpu.memory_space<vmem>>, vector<64x128xf32>
    %cst = arith.constant dense<0.000000e+00> : vector<8x128xf32>
    %2 = tpu.matmul %0, %1, %cst {dimension_numbers = #tpu.dot_dimension_numbers<[1], [0], [0], [1], [0, 0, 1, 1], [], []>} : vector<8x64xf32>, vector<64x128xf32>, vector<8x128xf32> -> vector<8x128xf32>
    %c0_3 = arith.constant 0 : index
    %c0_4 = arith.constant 0 : index
    %3 = vector.load %arg3[%c0_3, %c0_4] : memref<1x128xf32, #tpu.memory_space<vmem>>, vector<1x128xf32>
    %4 = vector.broadcast %3 : vector<1x128xf32> to vector<8x128xf32>
    %5 = arith.addf %2, %4 : vector<8x128xf32>
    %cst_5 = arith.constant 0.000000e+00 : f32
    %6 = vector.broadcast %cst_5 : f32 to vector<8x128xf32>
    %7 = arith.maximumf %5, %6 : vector<8x128xf32>
    %c0_6 = arith.constant 0 : index
    %c0_7 = arith.constant 0 : index
    %8 = vector.load %arg6[%c0_6, %c0_7] : memref<8x128xf32, #tpu.memory_space<vmem>>, vector<8x128xf32>
    tpu.vector_store %arg6[%c0_6, %c0_7], %7 {strides = array<i32>} : memref<8x128xf32, #tpu.memory_space<vmem>>, vector<8x128xf32>,
    %c0_8 = arith.constant 0 : index
    %c0_9 = arith.constant 0 : index
    %9 = vector.load %arg4[%c0_8, %c0_9] : memref<128x128xf32, #tpu.memory_space<vmem>>, vector<128x128xf32>
    %cst_10 = arith.constant dense<0.000000e+00> : vector<8x128xf32>
    %10 = tpu.matmul %7, %9, %cst_10 {dimension_numbers = #tpu.dot_dimension_numbers<[1], [0], [0], [1], [0, 0, 1, 1], [], []>} : vector<8x128xf32>, vector<128x128xf32>, vector<8x128xf32> -> vector<8x128xf32>
    %c0_11 = arith.constant 0 : index
    %c0_12 = arith.constant 0 : index
    %11 = vector.load %arg5[%c0_11, %c0_12] : memref<1x128xf32, #tpu.memory_space<vmem>>, vector<1x128xf32>
    %12 = vector.broadcast %11 : vector<1x128xf32> to vector<8x128xf32>
    %13 = arith.addf %10, %12 : vector<8x128xf32>
    %14 = arith.mulf %13, %13 : vector<8x128xf32>
    %cst_13 = arith.constant dense<0.000000e+00> : vector<8xf32>
    %15 = vector.multi_reduction <add>, %14, %cst_13 [1] : vector<8x128xf32> to vector<8xf32>
    %16 = vector.shape_cast %15 : vector<8xf32> to vector<8x1xf32>
    %cst_14 = arith.constant 1.000000e-24 : f32
    %17 = vector.broadcast %cst_14 : f32 to vector<8x1xf32>
    %18 = arith.maximumf %16, %17 : vector<8x1xf32>
    %19 = math.rsqrt %18 : vector<8x1xf32>
    %20 = vector.broadcast %19 : vector<8x1xf32> to vector<8x128xf32>
    %21 = arith.mulf %13, %20 : vector<8x128xf32>
    %c0_15 = arith.constant 0 : index
    %c0_16 = arith.constant 0 : index
    %22 = vector.load %arg7[%c0_15, %c0_16] : memref<8x128xf32, #tpu.memory_space<vmem>>, vector<8x128xf32>
    tpu.vector_store %arg7[%c0_15, %c0_16], %21 {strides = array<i32>} : memref<8x128xf32, #tpu.memory_space<vmem>>, vector<8x128xf32>,
    return
  }
  func.func @transform_0(%arg0: i32) -> (i32, i32) {
    %c0_i32 = arith.constant 0 : i32
    %c0_i32_0 = arith.constant 0 : i32
    return %arg0, %c0_i32 : i32, i32
  }
  func.func @transform_1(%arg0: i32) -> (i32, i32) {
    %c0_i32 = arith.constant 0 : i32
    %c0_i32_0 = arith.constant 0 : i32
    %c0_i32_1 = arith.constant 0 : i32
    return %c0_i32, %c0_i32_0 : i32, i32
  }
  func.func @transform_2(%arg0: i32) -> (i32, i32) {
    %c0_i32 = arith.constant 0 : i32
    %c0_i32_0 = arith.constant 0 : i32
    %c0_i32_1 = arith.constant 0 : i32
    return %c0_i32, %c0_i32_0 : i32, i32
  }
  func.func @transform_3(%arg0: i32) -> (i32, i32) {
    %c0_i32 = arith.constant 0 : i32
    %c0_i32_0 = arith.constant 0 : i32
    %c0_i32_1 = arith.constant 0 : i32
    return %c0_i32, %c0_i32_0 : i32, i32
  }
  func.func @transform_4(%arg0: i32) -> (i32, i32) {
    %c0_i32 = arith.constant 0 : i32
    %c0_i32_0 = arith.constant 0 : i32
    %c0_i32_1 = arith.constant 0 : i32
    return %c0_i32, %c0_i32_0 : i32, i32
  }
  func.func @transform_5(%arg0: i32) -> (i32, i32) {
    %c0_i32 = arith.constant 0 : i32
    %c0_i32_0 = arith.constant 0 : i32
    return %arg0, %c0_i32 : i32, i32
  }
  func.func @transform_6(%arg0: i32) -> (i32, i32) {
    %c0_i32 = arith.constant 0 : i32
    %c0_i32_0 = arith.constant 0 : i32
    return %arg0, %c0_i32 : i32, i32
  }
}

module attributes {stable_mosaic.version = 11 : i64} {
  func.func @_embedding_net_kernel(%arg0: i32, %arg1: memref<8x64xf32, #tpu.memory_space<vmem>>, %arg2: memref<64x128xf32, #tpu.memory_space<vmem>>, %arg3: memref<1x128xf32, #tpu.memory_space<vmem>>, %arg4: memref<128x128xf32, #tpu.memory_space<vmem>>, %arg5: memref<1x128xf32, #tpu.memory_space<vmem>>, %arg6: memref<8x128xf32, #tpu.memory_space<vmem>>, %arg7: memref<8x128xf32, #tpu.memory_space<vmem>>) attributes {dimension_semantics = [#tpu.dimension_semantics<parallel>], iteration_bounds = array<i64: 1>, scalar_prefetch = 0 : i64, scratch_operands = 0 : i64, tpu.core_type = #tpu.core_type<tc>, window_params = [{transform_indices = @transform_0, window_bounds = array<i64: 8, 64>}, {pipeline_mode = #tpu.pipeline_mode<synchronous>, transform_indices = @transform_1, window_bounds = array<i64: 64, 128>}, {pipeline_mode = #tpu.pipeline_mode<synchronous>, transform_indices = @transform_2, window_bounds = array<i64: 1, 128>}, {pipeline_mode = #tpu.pipeline_mode<synchronous>, transform_indices = @transform_3, window_bounds = array<i64: 128, 128>}, {pipeline_mode = #tpu.pipeline_mode<synchronous>, transform_indices = @transform_4, window_bounds = array<i64: 1, 128>}, {transform_indices = @transform_5, window_bounds = array<i64: 8, 128>}, {transform_indices = @transform_6, window_bounds = array<i64: 8, 128>}]} {
    %c0 = arith.constant 0 : index
    %c0_0 = arith.constant 0 : index
    %0 = vector.load %arg1[%c0, %c0_0] : memref<8x64xf32, #tpu.memory_space<vmem>>, vector<8x64xf32>
    %c0_1 = arith.constant 0 : index
    %c0_2 = arith.constant 0 : index
    %1 = vector.load %arg2[%c0_1, %c0_2] : memref<64x128xf32, #tpu.memory_space<vmem>>, vector<64x128xf32>
    %cst = arith.constant dense<0.000000e+00> : vector<8x128xf32>
    %2 = tpu.matmul %0, %1, %cst {dimension_numbers = #tpu.dot_dimension_numbers<[1], [0], [0], [1], [0, 0, 1, 1], [], []>} : vector<8x64xf32>, vector<64x128xf32>, vector<8x128xf32> -> vector<8x128xf32>
    %c0_3 = arith.constant 0 : index
    %c0_4 = arith.constant 0 : index
    %3 = vector.load %arg3[%c0_3, %c0_4] : memref<1x128xf32, #tpu.memory_space<vmem>>, vector<1x128xf32>
    %4 = vector.broadcast %3 : vector<1x128xf32> to vector<8x128xf32>
    %5 = arith.addf %2, %4 : vector<8x128xf32>
    %cst_5 = arith.constant 0.000000e+00 : f32
    %6 = vector.broadcast %cst_5 : f32 to vector<8x128xf32>
    %7 = arith.maximumf %5, %6 : vector<8x128xf32>
    %c0_6 = arith.constant 0 : index
    %c0_7 = arith.constant 0 : index
    %8 = vector.load %arg6[%c0_6, %c0_7] : memref<8x128xf32, #tpu.memory_space<vmem>>, vector<8x128xf32>
    tpu.vector_store %arg6[%c0_6, %c0_7], %7 {strides = array<i32>} : memref<8x128xf32, #tpu.memory_space<vmem>>, vector<8x128xf32>,
    %c0_8 = arith.constant 0 : index
    %c0_9 = arith.constant 0 : index
    %9 = vector.load %arg4[%c0_8, %c0_9] : memref<128x128xf32, #tpu.memory_space<vmem>>, vector<128x128xf32>
    %cst_10 = arith.constant dense<0.000000e+00> : vector<8x128xf32>
    %10 = tpu.matmul %7, %9, %cst_10 {dimension_numbers = #tpu.dot_dimension_numbers<[1], [0], [0], [1], [0, 0, 1, 1], [], []>} : vector<8x128xf32>, vector<128x128xf32>, vector<8x128xf32> -> vector<8x128xf32>
    %c0_11 = arith.constant 0 : index
    %c0_12 = arith.constant 0 : index
    %11 = vector.load %arg5[%c0_11, %c0_12] : memref<1x128xf32, #tpu.memory_space<vmem>>, vector<1x128xf32>
    %12 = vector.broadcast %11 : vector<1x128xf32> to vector<8x128xf32>
    %13 = arith.addf %10, %12 : vector<8x128xf32>
    %14 = arith.mulf %13, %13 : vector<8x128xf32>
    %cst_13 = arith.constant dense<0.000000e+00> : vector<8xf32>
    %15 = vector.multi_reduction <add>, %14, %cst_13 [1] : vector<8x128xf32> to vector<8xf32>
    %16 = vector.shape_cast %15 : vector<8xf32> to vector<8x1xf32>
    %cst_14 = arith.constant 1.000000e-24 : f32
    %17 = vector.broadcast %cst_14 : f32 to vector<8x1xf32>
    %18 = arith.maximumf %16, %17 : vector<8x1xf32>
    %19 = math.rsqrt %18 : vector<8x1xf32>
    %20 = vector.broadcast %19 : vector<8x1xf32> to vector<8x128xf32>
    %21 = arith.mulf %13, %20 : vector<8x128xf32>
    %c0_15 = arith.constant 0 : index
    %c0_16 = arith.constant 0 : index
    %22 = vector.load %arg7[%c0_15, %c0_16] : memref<8x128xf32, #tpu.memory_space<vmem>>, vector<8x128xf32>
    tpu.vector_store %arg7[%c0_15, %c0_16], %21 {strides = array<i32>} : memref<8x128xf32, #tpu.memory_space<vmem>>, vector<8x128xf32>,
    return
  }
  func.func @transform_0(%arg0: i32) -> (i32, i32) {
    %c0_i32 = arith.constant 0 : i32
    %c0_i32_0 = arith.constant 0 : i32
    return %arg0, %c0_i32 : i32, i32
  }
  func.func @transform_1(%arg0: i32) -> (i32, i32) {
    %c0_i32 = arith.constant 0 : i32
    %c0_i32_0 = arith.constant 0 : i32
    %c0_i32_1 = arith.constant 0 : i32
    return %c0_i32, %c0_i32_0 : i32, i32
  }
  func.func @transform_2(%arg0: i32) -> (i32, i32) {
    %c0_i32 = arith.constant 0 : i32
    %c0_i32_0 = arith.constant 0 : i32
    %c0_i32_1 = arith.constant 0 : i32
    return %c0_i32, %c0_i32_0 : i32, i32
  }
  func.func @transform_3(%arg0: i32) -> (i32, i32) {
    %c0_i32 = arith.constant 0 : i32
    %c0_i32_0 = arith.constant 0 : i32
    %c0_i32_1 = arith.constant 0 : i32
    return %c0_i32, %c0_i32_0 : i32, i32
  }
  func.func @transform_4(%arg0: i32) -> (i32, i32) {
    %c0_i32 = arith.constant 0 : i32
    %c0_i32_0 = arith.constant 0 : i32
    %c0_i32_1 = arith.constant 0 : i32
    return %c0_i32, %c0_i32_0 : i32, i32
  }
  func.func @transform_5(%arg0: i32) -> (i32, i32) {
    %c0_i32 = arith.constant 0 : i32
    %c0_i32_0 = arith.constant 0 : i32
    return %arg0, %c0_i32 : i32, i32
  }
  func.func @transform_6(%arg0: i32) -> (i32, i32) {
    %c0_i32 = arith.constant 0 : i32
    %c0_i32_0 = arith.constant 0 : i32
    return %arg0, %c0_i32 : i32, i32
  }
}

</mosaic_0001>

<llo_original>
// kernel: tpu_custom_call.1
$region0: #{tpu_custom_call.1}
  #allocation0 [shape = 'u32[]', space=smem, size = 0x4, offset = 0x4, fixed_abs, tag = 'smem constant byte address 0x4 - core index']
  #allocation1 [shape = 'u32[144,128]{1,0:T(1,128)}', space=vmem, size = 0x12000, scoped, tag = 'internal scratch']
  %s0 = inlined_call_operand.hbm [shape: f32[8,64], index: 0, kind: input, shape index: {}]
  %s1 = inlined_call_operand.hbm [shape: f32[64,128], index: 1, kind: input, shape index: {}]
  %s2 = inlined_call_operand.vmem [shape: f32[1,128], index: 2, kind: input, shape index: {}]
  %s3 = inlined_call_operand.hbm [shape: f32[128,128], index: 3, kind: input, shape index: {}]
  %s4 = inlined_call_operand.vmem [shape: f32[1,128], index: 4, kind: input, shape index: {}]
  %s5 = inlined_call_operand.hbm [shape: f32[8,128], index: 5, kind: output, shape index: {0}]
  %s6 = inlined_call_operand.hbm [shape: f32[8,128], index: 6, kind: output, shape index: {1}]
  %7 = xla_tuple %s5, %s6
  %s8 = sld [smem:[#allocation0]]
  $region50: #{tpu_custom_call.1} parent=0
    _
  %s10 = ssub.s32 1, %s8
  %s11 = scalar_select 0, %s10, %s8
  $region1: #{tpu_custom_call.1} parent=0
    #allocation2 [shape = 'u8[4096]{0}', space=vmem, size = 0x1000, scoped, tag = 'input window, operand 0, single buffered']
    #allocation3 [shape = 's32[1]{0}', space=sflag, size = 0x4, scoped, tag = 'scoped memory for tpu_custom_call.1']
    #allocation4 [shape = 's32[1]{0}', space=sflag, size = 0x4, scoped, tag = 'scoped memory for tpu_custom_call.1']
    #allocation5 [shape = 'u8[32768]{0}', space=vmem, size = 0x8000, scoped, tag = 'input window, operand 1, single buffered']
    #allocation6 [shape = 's32[1]{0}', space=sflag, size = 0x4, scoped, tag = 'scoped memory for tpu_custom_call.1']
    #allocation7 [shape = 'u8[65536]{0}', space=vmem, size = 0x10000, scoped, tag = 'input window, operand 3, single buffered']
    #allocation8 [shape = 'u8[4096]{0}', space=vmem, size = 0x1000, scoped, tag = 'output window, operand 0, single buffered']
    #allocation9 [shape = 'u8[4096]{0}', space=vmem, size = 0x1000, scoped, tag = 'output window, operand 1, single buffered']
    #allocation10 [shape = 's32[1]{0}', space=sflag, size = 0x4, scoped, tag = 'scoped memory for tpu_custom_call.1']
    %12 = vsyncpa [#allocation3], 0
    %13 = vsyncpa [#allocation6], 0
    %14 = vsyncpa [#allocation4], 0
    %15 = vsyncpa [#allocation10], 0
    // Predicated region
    $region2: #{tpu_custom_call.1} parent=1 // pred_check
      _
    $region3: #{tpu_custom_call.1} parent=1 // pred_check_branch
      %17 = sbr.rel (0) target = $region5
    $region4: #{tpu_custom_call.1} parent=1 // pred_region
      %s19 = ssub.s32 128, 128
      %20 = vsyncadd [#allocation3], %s19
      %s22 = sshll.u32 [#allocation2], 4
      %s23 = int_to_ptr.vmem [resolvable:$true] %s22
      %25 = dma.hbm_to_vmem [thread:$0]  %s0, 128, %s23, [#allocation3]
    $region5: #{tpu_custom_call.1} parent=1 // pred_fallthru
      _
    // Predicated region
    $region6: #{tpu_custom_call.1} parent=1 // pred_check
      _
    $region7: #{tpu_custom_call.1} parent=1 // pred_check_branch
      %27 = sbr.rel (0) target = $region9
    $region8: #{tpu_custom_call.1} parent=1 // pred_region
      %s29 = ssub.s32 1024, 1024
      %30 = vsyncadd [#allocation6], %s29
      %s31 = sshll.u32 [#allocation5], 4
      %s32 = int_to_ptr.vmem [resolvable:$true] %s31
      %37 = dma.hbm_to_vmem [thread:$0]  %s1, 1024, %s32, [#allocation6], 128, 128, 8
    $region9: #{tpu_custom_call.1} parent=1 // pred_fallthru
      _
    // Predicated region
    $region10: #{tpu_custom_call.1} parent=1 // pred_check
      _
    $region11: #{tpu_custom_call.1} parent=1 // pred_check_branch
      %39 = sbr.rel (0) target = $region13
    $region12: #{tpu_custom_call.1} parent=1 // pred_region
      _
    $region13: #{tpu_custom_call.1} parent=1 // pred_fallthru
      _
    // Predicated region
    $region14: #{tpu_custom_call.1} parent=1 // pred_check
      _
    $region15: #{tpu_custom_call.1} parent=1 // pred_check_branch
      %41 = sbr.rel (0) target = $region17
    $region16: #{tpu_custom_call.1} parent=1 // pred_region
      %s43 = ssub.s32 2048, 2048
      %44 = vsyncadd [#allocation6], %s43
      %s45 = sshll.u32 [#allocation7], 4
      %s46 = int_to_ptr.vmem [resolvable:$true] %s45
      %51 = dma.hbm_to_vmem [thread:$0]  %s3, 2048, %s46, [#allocation6], 128, 128, 8
    $region17: #{tpu_custom_call.1} parent=1 // pred_fallthru
      _
    // Predicated region
    $region18: #{tpu_custom_call.1} parent=1 // pred_check
      _
    $region19: #{tpu_custom_call.1} parent=1 // pred_check_branch
      %53 = sbr.rel (0) target = $region21
    $region20: #{tpu_custom_call.1} parent=1 // pred_region
      _
    $region21: #{tpu_custom_call.1} parent=1 // pred_fallthru
      _
    // Predicated region
    $region22: #{tpu_custom_call.1} parent=1 // pred_check
      _
    $region23: #{tpu_custom_call.1} parent=1 // pred_check_branch
      %55 = sbr.rel (0) target = $region25
    $region24: #{tpu_custom_call.1} parent=1 // pred_region
      %56 = dma.done [#allocation3], 128
    $region25: #{tpu_custom_call.1} parent=1 // pred_fallthru
      _
    // Predicated region
    $region26: #{tpu_custom_call.1} parent=1 // pred_check
      _
    $region27: #{tpu_custom_call.1} parent=1 // pred_check_branch
      %58 = sbr.rel (0) target = $region29
    $region28: #{tpu_custom_call.1} parent=1 // pred_region
      %59 = dma.done [#allocation6], 1024
    $region29: #{tpu_custom_call.1} parent=1 // pred_fallthru
      _
    // Predicated region
    $region30: #{tpu_custom_call.1} parent=1 // pred_check
      _
    $region31: #{tpu_custom_call.1} parent=1 // pred_check_branch
      %61 = sbr.rel (0) target = $region33
    $region32: #{tpu_custom_call.1} parent=1 // pred_region
      %62 = dma.done [#allocation6], 2048
    $region33: #{tpu_custom_call.1} parent=1 // pred_fallthru
      _
    %v63 = vld [vmem:[#allocation2] sm:$0xff]
    %v64 = vld [vmem:[#allocation5] sm:$0xff]
    %v65 = vld [vmem:[#allocation5 + $0x8] sm:$0xff]
    %v66 = vld [vmem:[#allocation5 + $0x10] sm:$0xff]
    %v67 = vld [vmem:[#allocation5 + $0x18] sm:$0xff]
    %v68 = vld [vmem:[#allocation5 + $0x20] sm:$0xff]
    %v69 = vld [vmem:[#allocation5 + $0x28] sm:$0xff]
    %v70 = vld [vmem:[#allocation5 + $0x30] sm:$0xff]
    %v71 = vld [vmem:[#allocation5 + $0x38] sm:$0xff]
    %v72 = vld [vmem:[%s2] sm:$0x1]
    %v74 = vlaneseq
    %v75 = vshrl.u32 %v74, 7
    %v76 = vsub.s32 0, %v75
    %v77 = vrot.slane %v72, %v76
    %vm79 = vcmask 523264
    %v81 = vsel %vm79, %v63, 0
    %83 = vmatprep.subr.mxu0 0.0
    %84 = vmatpush1.msra.mxu0 %v64
    %85 = vmatprep.subr.mxu0 0.0
    %86 = vmatpush1.msra.mxu0 %v65
    %87 = vmatprep.subr.mxu0 0.0
    %88 = vmatpush1.msra.mxu0 %v66
    %89 = vmatprep.subr.mxu0 0.0
    %90 = vmatpush1.msra.mxu0 %v67
    %91 = vmatprep.subr.mxu0 0.0
    %92 = vmatpush1.msra.mxu0 %v68
    %93 = vmatprep.subr.mxu0 0.0
    %94 = vmatpush1.msra.mxu0 %v69
    %95 = vmatprep.subr.mxu0 0.0
    %96 = vmatpush1.msra.mxu0 %v70
    %97 = vmatprep.subr.mxu0 0.0
    %98 = vmatpush1.msra.mxu0 %v71
    %99 = vmatprep.subr.mxu0 0.0
    %100 = vmatpush1.msra.mxu0 0.0
    %101 = vmatprep.subr.mxu0 0.0
    %102 = vmatpush1.msra.mxu0 0.0
    %103 = vmatprep.subr.mxu0 0.0
    %104 = vmatpush1.msra.mxu0 0.0
    %105 = vmatprep.subr.mxu0 0.0
    %106 = vmatpush1.msra.mxu0 0.0
    %107 = vmatprep.subr.mxu0 0.0
    %108 = vmatpush1.msra.mxu0 0.0
    %109 = vmatprep.subr.mxu0 0.0
    %110 = vmatpush1.msra.mxu0 0.0
    %111 = vmatprep.subr.mxu0 0.0
    %112 = vmatpush1.msra.mxu0 0.0
    %113 = vmatprep.subr.mxu0 0.0
    %114 = vmatpush1.msra.mxu0 0.0
    %115 = vmatprep.subr.mxu0 0.0
    %116 = vmatpush1.msra.mxu0 0.0
    %117 = vmatprep.subr.mxu0 0.0
    %118 = vmatpush1.msra.mxu0 0.0
    %119 = vmatprep.subr.mxu0 0.0
    %120 = vmatpush1.msra.mxu0 0.0
    %121 = vmatprep.subr.mxu0 0.0
    %122 = vmatpush1.msra.mxu0 0.0
    %123 = vmatprep.subr.mxu0 0.0
    %124 = vmatpush1.msra.mxu0 0.0
    %125 = vmatprep.subr.mxu0 0.0
    %126 = vmatpush1.msra.mxu0 0.0
    %127 = vmatprep.subr.mxu0 0.0
    %128 = vmatpush1.msra.mxu0 0.0
    %129 = vmatprep.subr.mxu0 0.0
    %130 = vmatpush1.msra.mxu0 0.0
    %131 = vmatprep.subr.mxu0 0.0
    %132 = vmatpush1.msra.mxu0 0.0
    %133 = vmatprep.subr.mxu0 0.0
    %134 = vmatpush1.msra.mxu0 0.0
    %135 = vmatprep.subr.mxu0 0.0
    %136 = vmatpush1.msra.mxu0 0.0
    %137 = vmatprep.subr.mxu0 0.0
    %138 = vmatpush1.msra.mxu0 0.0
    %139 = vmatprep.subr.mxu0 0.0
    %140 = vmatpush1.msra.mxu0 0.0
    %141 = vmatprep.subr.mxu0 0.0
    %142 = vmatpush1.msra.mxu0 0.0
    %143 = vmatprep.subr.mxu0 0.0
    %144 = vmatpush1.msra.mxu0 0.0
    %145 = vmatprep.subr.mxu0 0.0
    %146 = vmatpush1.msra.mxu0 0.0
    %147 = vmatprep.mubr.f32.mxu0 0.0
    %148 = vmatmul.mubr.f32.gmra.mrb[0].mxu0 %v81
    %v149 = vpop.f32.mrb[0].mxu0
    %v150 = vadd.f32 %v77, %v149
    %v151 = vpop.f32.mrb[0].mxu0
    %152 = vdwg.mxu0
    %v153 = vmax.f32 %v150, 0.0
    %154 = vst [vmem:[#allocation8] sm:$0xff] %v153
    %v155 = vld [vmem:[#allocation7] sm:$0xff]
    %v156 = vld [vmem:[#allocation7 + $0x8] sm:$0xff]
    %v157 = vld [vmem:[#allocation7 + $0x10] sm:$0xff]
    %v158 = vld [vmem:[#allocation7 + $0x18] sm:$0xff]
    %v159 = vld [vmem:[#allocation7 + $0x20] sm:$0xff]
    %v160 = vld [vmem:[#allocation7 + $0x28] sm:$0xff]
    %v161 = vld [vmem:[#allocation7 + $0x30] sm:$0xff]
    %v162 = vld [vmem:[#allocation7 + $0x38] sm:$0xff]
    %v163 = vld [vmem:[#allocation7 + $0x40] sm:$0xff]
    %v164 = vld [vmem:[#allocation7 + $0x48] sm:$0xff]
    %v165 = vld [vmem:[#allocation7 + $0x50] sm:$0xff]
    %v166 = vld [vmem:[#allocation7 + $0x58] sm:$0xff]
    %v167 = vld [vmem:[#allocation7 + $0x60] sm:$0xff]
    %v168 = vld [vmem:[#allocation7 + $0x68] sm:$0xff]
    %v169 = vld [vmem:[#allocation7 + $0x70] sm:$0xff]
    %v170 = vld [vmem:[#allocation7 + $0x78] sm:$0xff]
    %v171 = vld [vmem:[%s4] sm:$0x1]
    %v173 = vlaneseq
    %v174 = vshrl.u32 %v173, 7
    %v175 = vsub.s32 0, %v174
    %v176 = vrot.slane %v171, %v175
    %178 = vmatprep.subr.mxu0 0.0
    %179 = vmatpush1.msra.mxu0 %v155
    %180 = vmatprep.subr.mxu0 0.0
    %181 = vmatpush1.msra.mxu0 %v156
    %182 = vmatprep.subr.mxu0 0.0
    %183 = vmatpush1.msra.mxu0 %v157
    %184 = vmatprep.subr.mxu0 0.0
    %185 = vmatpush1.msra.mxu0 %v158
    %186 = vmatprep.subr.mxu0 0.0
    %187 = vmatpush1.msra.mxu0 %v159
    %188 = vmatprep.subr.mxu0 0.0
    %189 = vmatpush1.msra.mxu0 %v160
    %190 = vmatprep.subr.mxu0 0.0
    %191 = vmatpush1.msra.mxu0 %v161
    %192 = vmatprep.subr.mxu0 0.0
    %193 = vmatpush1.msra.mxu0 %v162
    %194 = vmatprep.subr.mxu0 0.0
    %195 = vmatpush1.msra.mxu0 %v163
    %196 = vmatprep.subr.mxu0 0.0
    %197 = vmatpush1.msra.mxu0 %v164
    %198 = vmatprep.subr.mxu0 0.0
    %199 = vmatpush1.msra.mxu0 %v165
    %200 = vmatprep.subr.mxu0 0.0
    %201 = vmatpush1.msra.mxu0 %v166
    %202 = vmatprep.subr.mxu0 0.0
    %203 = vmatpush1.msra.mxu0 %v167
    %204 = vmatprep.subr.mxu0 0.0
    %205 = vmatpush1.msra.mxu0 %v168
    %206 = vmatprep.subr.mxu0 0.0
    %207 = vmatpush1.msra.mxu0 %v169
    %208 = vmatprep.subr.mxu0 0.0
    %209 = vmatpush1.msra.mxu0 %v170
    %210 = vmatprep.subr.mxu0 0.0
    %211 = vmatpush1.msra.mxu0 0.0
    %212 = vmatprep.subr.mxu0 0.0
    %213 = vmatpush1.msra.mxu0 0.0
    %214 = vmatprep.subr.mxu0 0.0
    %215 = vmatpush1.msra.mxu0 0.0
    %216 = vmatprep.subr.mxu0 0.0
    %217 = vmatpush1.msra.mxu0 0.0
    %218 = vmatprep.subr.mxu0 0.0
    %219 = vmatpush1.msra.mxu0 0.0
    %220 = vmatprep.subr.mxu0 0.0
    %221 = vmatpush1.msra.mxu0 0.0
    %222 = vmatprep.subr.mxu0 0.0
    %223 = vmatpush1.msra.mxu0 0.0
    %224 = vmatprep.subr.mxu0 0.0
    %225 = vmatpush1.msra.mxu0 0.0
    %226 = vmatprep.subr.mxu0 0.0
    %227 = vmatpush1.msra.mxu0 0.0
    %228 = vmatprep.subr.mxu0 0.0
    %229 = vmatpush1.msra.mxu0 0.0
    %230 = vmatprep.subr.mxu0 0.0
    %231 = vmatpush1.msra.mxu0 0.0
    %232 = vmatprep.subr.mxu0 0.0
    %233 = vmatpush1.msra.mxu0 0.0
    %234 = vmatprep.subr.mxu0 0.0
    %235 = vmatpush1.msra.mxu0 0.0
    %236 = vmatprep.subr.mxu0 0.0
    %237 = vmatpush1.msra.mxu0 0.0
    %238 = vmatprep.subr.mxu0 0.0
    %239 = vmatpush1.msra.mxu0 0.0
    %240 = vmatprep.subr.mxu0 0.0
    %241 = vmatpush1.msra.mxu0 0.0
    %242 = vmatprep.mubr.f32.mxu0 0.0
    %243 = vmatmul.mubr.f32.gmra.mrb[0].mxu0 %v153
    %v244 = vpop.f32.mrb[0].mxu0
    %v245 = vadd.f32 %v176, %v244
    %v246 = vpop.f32.mrb[0].mxu0
    %247 = vdwg.mxu0
    %v248 = vmul.f32 %v245, %v245
    %249 = vadd.xlane.f32.xlu0 %v248
    %v250 = vpop.xlane.xlu0 %249
    %v251 = vmax.f32 %v250, 1e-24
    %v252 = vrsqrt.pop %v251
    %v253 = vmul.f32 %v245, %v252
    %254 = vst [vmem:[#allocation9] sm:$0xff] %v253
    // Predicated region
    $region34: #{tpu_custom_call.1} parent=1 // pred_check
      _
    $region35: #{tpu_custom_call.1} parent=1 // pred_check_branch
      %256 = sbr.rel (0) target = $region37
    $region36: #{tpu_custom_call.1} parent=1 // pred_region
      %s258 = ssub.s32 128, 128
      %259 = vsyncadd [#allocation4], %s258
      %s261 = sshll.u32 [#allocation8], 4
      %s262 = int_to_ptr.vmem [resolvable:$true] %s261
      %264 = dma.vmem_to_hbm [thread:$0]  %s262, 128, %s5, [#allocation4]
    $region37: #{tpu_custom_call.1} parent=1 // pred_fallthru
      _
    // Predicated region
    $region38: #{tpu_custom_call.1} parent=1 // pred_check
      _
    $region39: #{tpu_custom_call.1} parent=1 // pred_check_branch
      %266 = sbr.rel (0) target = $region41
    $region40: #{tpu_custom_call.1} parent=1 // pred_region
      %s268 = ssub.s32 128, 128
      %269 = vsyncadd [#allocation10], %s268
      %s271 = sshll.u32 [#allocation9], 4
      %s272 = int_to_ptr.vmem [resolvable:$true] %s271
      %274 = dma.vmem_to_hbm [thread:$0]  %s272, 128, %s6, [#allocation10]
    $region41: #{tpu_custom_call.1} parent=1 // pred_fallthru
      _
    // Predicated region
    $region42: #{tpu_custom_call.1} parent=1 // pred_check
      _
    $region43: #{tpu_custom_call.1} parent=1 // pred_check_branch
      %276 = sbr.rel (0) target = $region45
    $region44: #{tpu_custom_call.1} parent=1 // pred_region
      %277 = dma.done [#allocation4], 128
    $region45: #{tpu_custom_call.1} parent=1 // pred_fallthru
      _
    // Predicated region
    $region46: #{tpu_custom_call.1} parent=1 // pred_check
      _
    $region47: #{tpu_custom_call.1} parent=1 // pred_check_branch
      %279 = sbr.rel (0) target = $region49
    $region48: #{tpu_custom_call.1} parent=1 // pred_region
      %280 = dma.done [#allocation10], 128
    $region49: #{tpu_custom_call.1} parent=1 // pred_fallthru
      _
    %281 = vsyncpa [#allocation3], 1
    %282 = vsyncpa [#allocation6], 1
    %283 = vsyncpa [#allocation4], 1
    %284 = vsyncpa [#allocation10], 1

// kernel: tpu_custom_call.1
$region0: #{tpu_custom_call.1}
  #allocation0 [shape = 'u32[]', space=smem, size = 0x4, offset = 0x4, fixed_abs, tag = 'smem constant byte address 0x4 - core index']
  #allocation1 [shape = 'u32[144,128]{1,0:T(1,128)}', space=vmem, size = 0x12000, scoped, tag = 'internal scratch']
  %s0 = inlined_call_operand.hbm [shape: f32[8,64], index: 0, kind: input, shape index: {}]
  %s1 = inlined_call_operand.hbm [shape: f32[64,128], index: 1, kind: input, shape index: {}]
  %s2 = inlined_call_operand.vmem [shape: f32[1,128], index: 2, kind: input, shape index: {}]
  %s3 = inlined_call_operand.hbm [shape: f32[128,128], index: 3, kind: input, shape index: {}]
  %s4 = inlined_call_operand.vmem [shape: f32[1,128], index: 4, kind: input, shape index: {}]
  %s5 = inlined_call_operand.hbm [shape: f32[8,128], index: 5, kind: output, shape index: {0}]
  %s6 = inlined_call_operand.hbm [shape: f32[8,128], index: 6, kind: output, shape index: {1}]
  %7 = xla_tuple %s5, %s6
  %s8 = sld [smem:[#allocation0]]
  $region50: #{tpu_custom_call.1} parent=0
    _
  %s10 = ssub.s32 1, %s8
  %s11 = scalar_select 0, %s10, %s8
  $region1: #{tpu_custom_call.1} parent=0
    #allocation2 [shape = 'u8[4096]{0}', space=vmem, size = 0x1000, scoped, tag = 'input window, operand 0, single buffered']
    #allocation3 [shape = 's32[1]{0}', space=sflag, size = 0x4, scoped, tag = 'scoped memory for tpu_custom_call.1']
    #allocation4 [shape = 's32[1]{0}', space=sflag, size = 0x4, scoped, tag = 'scoped memory for tpu_custom_call.1']
    #allocation5 [shape = 'u8[32768]{0}', space=vmem, size = 0x8000, scoped, tag = 'input window, operand 1, single buffered']
    #allocation6 [shape = 's32[1]{0}', space=sflag, size = 0x4, scoped, tag = 'scoped memory for tpu_custom_call.1']
    #allocation7 [shape = 'u8[65536]{0}', space=vmem, size = 0x10000, scoped, tag = 'input window, operand 3, single buffered']
    #allocation8 [shape = 'u8[4096]{0}', space=vmem, size = 0x1000, scoped, tag = 'output window, operand 0, single buffered']
    #allocation9 [shape = 'u8[4096]{0}', space=vmem, size = 0x1000, scoped, tag = 'output window, operand 1, single buffered']
    #allocation10 [shape = 's32[1]{0}', space=sflag, size = 0x4, scoped, tag = 'scoped memory for tpu_custom_call.1']
    %12 = vsyncpa [#allocation3], 0
    %13 = vsyncpa [#allocation6], 0
    %14 = vsyncpa [#allocation4], 0
    %15 = vsyncpa [#allocation10], 0
    // Predicated region
    $region2: #{tpu_custom_call.1} parent=1 // pred_check
      _
    $region3: #{tpu_custom_call.1} parent=1 // pred_check_branch
      %17 = sbr.rel (0) target = $region5
    $region4: #{tpu_custom_call.1} parent=1 // pred_region
      %s19 = ssub.s32 128, 128
      %20 = vsyncadd [#allocation3], %s19
      %s22 = sshll.u32 [#allocation2], 4
      %s23 = int_to_ptr.vmem [resolvable:$true] %s22
      %25 = dma.hbm_to_vmem [thread:$0]  %s0, 128, %s23, [#allocation3]
    $region5: #{tpu_custom_call.1} parent=1 // pred_fallthru
      _
    // Predicated region
    $region6: #{tpu_custom_call.1} parent=1 // pred_check
      _
    $region7: #{tpu_custom_call.1} parent=1 // pred_check_branch
      %27 = sbr.rel (0) target = $region9
    $region8: #{tpu_custom_call.1} parent=1 // pred_region
      %s29 = ssub.s32 1024, 1024
      %30 = vsyncadd [#allocation6], %s29
      %s31 = sshll.u32 [#allocation5], 4
      %s32 = int_to_ptr.vmem [resolvable:$true] %s31
      %37 = dma.hbm_to_vmem [thread:$0]  %s1, 1024, %s32, [#allocation6], 128, 128, 8
    $region9: #{tpu_custom_call.1} parent=1 // pred_fallthru
      _
    // Predicated region
    $region10: #{tpu_custom_call.1} parent=1 // pred_check
      _
    $region11: #{tpu_custom_call.1} parent=1 // pred_check_branch
      %39 = sbr.rel (0) target = $region13
    $region12: #{tpu_custom_call.1} parent=1 // pred_region
      _
    $region13: #{tpu_custom_call.1} parent=1 // pred_fallthru
      _
    // Predicated region
    $region14: #{tpu_custom_call.1} parent=1 // pred_check
      _
    $region15: #{tpu_custom_call.1} parent=1 // pred_check_branch
      %41 = sbr.rel (0) target = $region17
    $region16: #{tpu_custom_call.1} parent=1 // pred_region
      %s43 = ssub.s32 2048, 2048
      %44 = vsyncadd [#allocation6], %s43
      %s45 = sshll.u32 [#allocation7], 4
      %s46 = int_to_ptr.vmem [resolvable:$true] %s45
      %51 = dma.hbm_to_vmem [thread:$0]  %s3, 2048, %s46, [#allocation6], 128, 128, 8
    $region17: #{tpu_custom_call.1} parent=1 // pred_fallthru
      _
    // Predicated region
    $region18: #{tpu_custom_call.1} parent=1 // pred_check
      _
    $region19: #{tpu_custom_call.1} parent=1 // pred_check_branch
      %53 = sbr.rel (0) target = $region21
    $region20: #{tpu_custom_call.1} parent=1 // pred_region
      _
    $region21: #{tpu_custom_call.1} parent=1 // pred_fallthru
      _
    // Predicated region
    $region22: #{tpu_custom_call.1} parent=1 // pred_check
      _
    $region23: #{tpu_custom_call.1} parent=1 // pred_check_branch
      %55 = sbr.rel (0) target = $region25
    $region24: #{tpu_custom_call.1} parent=1 // pred_region
      %56 = dma.done [#allocation3], 128
    $region25: #{tpu_custom_call.1} parent=1 // pred_fallthru
      _
    // Predicated region
    $region26: #{tpu_custom_call.1} parent=1 // pred_check
      _
    $region27: #{tpu_custom_call.1} parent=1 // pred_check_branch
      %58 = sbr.rel (0) target = $region29
    $region28: #{tpu_custom_call.1} parent=1 // pred_region
      %59 = dma.done [#allocation6], 1024
    $region29: #{tpu_custom_call.1} parent=1 // pred_fallthru
      _
    // Predicated region
    $region30: #{tpu_custom_call.1} parent=1 // pred_check
      _
    $region31: #{tpu_custom_call.1} parent=1 // pred_check_branch
      %61 = sbr.rel (0) target = $region33
    $region32: #{tpu_custom_call.1} parent=1 // pred_region
      %62 = dma.done [#allocation6], 2048
    $region33: #{tpu_custom_call.1} parent=1 // pred_fallthru
      _
    %v63 = vld [vmem:[#allocation2] sm:$0xff]
    %v64 = vld [vmem:[#allocation5] sm:$0xff]
    %v65 = vld [vmem:[#allocation5 + $0x8] sm:$0xff]
    %v66 = vld [vmem:[#allocation5 + $0x10] sm:$0xff]
    %v67 = vld [vmem:[#allocation5 + $0x18] sm:$0xff]
    %v68 = vld [vmem:[#allocation5 + $0x20] sm:$0xff]
    %v69 = vld [vmem:[#allocation5 + $0x28] sm:$0xff]
    %v70 = vld [vmem:[#allocation5 + $0x30] sm:$0xff]
    %v71 = vld [vmem:[#allocation5 + $0x38] sm:$0xff]
    %v72 = vld [vmem:[%s2] sm:$0x1]
    %v74 = vlaneseq
    %v75 = vshrl.u32 %v74, 7
    %v76 = vsub.s32 0, %v75
    %v77 = vrot.slane %v72, %v76
    %vm79 = vcmask 523264
    %v81 = vsel %vm79, %v63, 0
    %83 = vmatprep.subr.mxu0 0.0
    %84 = vmatpush1.msra.mxu0 %v64
    %85 = vmatprep.subr.mxu0 0.0
    %86 = vmatpush1.msra.mxu0 %v65
    %87 = vmatprep.subr.mxu0 0.0
    %88 = vmatpush1.msra.mxu0 %v66
    %89 = vmatprep.subr.mxu0 0.0
    %90 = vmatpush1.msra.mxu0 %v67
    %91 = vmatprep.subr.mxu0 0.0
    %92 = vmatpush1.msra.mxu0 %v68
    %93 = vmatprep.subr.mxu0 0.0
    %94 = vmatpush1.msra.mxu0 %v69
    %95 = vmatprep.subr.mxu0 0.0
    %96 = vmatpush1.msra.mxu0 %v70
    %97 = vmatprep.subr.mxu0 0.0
    %98 = vmatpush1.msra.mxu0 %v71
    %99 = vmatprep.subr.mxu0 0.0
    %100 = vmatpush1.msra.mxu0 0.0
    %101 = vmatprep.subr.mxu0 0.0
    %102 = vmatpush1.msra.mxu0 0.0
    %103 = vmatprep.subr.mxu0 0.0
    %104 = vmatpush1.msra.mxu0 0.0
    %105 = vmatprep.subr.mxu0 0.0
    %106 = vmatpush1.msra.mxu0 0.0
    %107 = vmatprep.subr.mxu0 0.0
    %108 = vmatpush1.msra.mxu0 0.0
    %109 = vmatprep.subr.mxu0 0.0
    %110 = vmatpush1.msra.mxu0 0.0
    %111 = vmatprep.subr.mxu0 0.0
    %112 = vmatpush1.msra.mxu0 0.0
    %113 = vmatprep.subr.mxu0 0.0
    %114 = vmatpush1.msra.mxu0 0.0
    %115 = vmatprep.subr.mxu0 0.0
    %116 = vmatpush1.msra.mxu0 0.0
    %117 = vmatprep.subr.mxu0 0.0
    %118 = vmatpush1.msra.mxu0 0.0
    %119 = vmatprep.subr.mxu0 0.0
    %120 = vmatpush1.msra.mxu0 0.0
    %121 = vmatprep.subr.mxu0 0.0
    %122 = vmatpush1.msra.mxu0 0.0
    %123 = vmatprep.subr.mxu0 0.0
    %124 = vmatpush1.msra.mxu0 0.0
    %125 = vmatprep.subr.mxu0 0.0
    %126 = vmatpush1.msra.mxu0 0.0
    %127 = vmatprep.subr.mxu0 0.0
    %128 = vmatpush1.msra.mxu0 0.0
    %129 = vmatprep.subr.mxu0 0.0
    %130 = vmatpush1.msra.mxu0 0.0
    %131 = vmatprep.subr.mxu0 0.0
    %132 = vmatpush1.msra.mxu0 0.0
    %133 = vmatprep.subr.mxu0 0.0
    %134 = vmatpush1.msra.mxu0 0.0
    %135 = vmatprep.subr.mxu0 0.0
    %136 = vmatpush1.msra.mxu0 0.0
    %137 = vmatprep.subr.mxu0 0.0
    %138 = vmatpush1.msra.mxu0 0.0
    %139 = vmatprep.subr.mxu0 0.0
    %140 = vmatpush1.msra.mxu0 0.0
    %141 = vmatprep.subr.mxu0 0.0
    %142 = vmatpush1.msra.mxu0 0.0
    %143 = vmatprep.subr.mxu0 0.0
    %144 = vmatpush1.msra.mxu0 0.0
    %145 = vmatprep.subr.mxu0 0.0
    %146 = vmatpush1.msra.mxu0 0.0
    %147 = vmatprep.mubr.f32.mxu0 0.0
    %148 = vmatmul.mubr.f32.gmra.mrb[0].mxu0 %v81
    %v149 = vpop.f32.mrb[0].mxu0
    %v150 = vadd.f32 %v77, %v149
    %v151 = vpop.f32.mrb[0].mxu0
    %152 = vdwg.mxu0
    %v153 = vmax.f32 %v150, 0.0
    %154 = vst [vmem:[#allocation8] sm:$0xff] %v153
    %v155 = vld [vmem:[#allocation7] sm:$0xff]
    %v156 = vld [vmem:[#allocation7 + $0x8] sm:$0xff]
    %v157 = vld [vmem:[#allocation7 + $0x10] sm:$0xff]
    %v158 = vld [vmem:[#allocation7 + $0x18] sm:$0xff]
    %v159 = vld [vmem:[#allocation7 + $0x20] sm:$0xff]
    %v160 = vld [vmem:[#allocation7 + $0x28] sm:$0xff]
    %v161 = vld [vmem:[#allocation7 + $0x30] sm:$0xff]
    %v162 = vld [vmem:[#allocation7 + $0x38] sm:$0xff]
    %v163 = vld [vmem:[#allocation7 + $0x40] sm:$0xff]
    %v164 = vld [vmem:[#allocation7 + $0x48] sm:$0xff]
    %v165 = vld [vmem:[#allocation7 + $0x50] sm:$0xff]
    %v166 = vld [vmem:[#allocation7 + $0x58] sm:$0xff]
    %v167 = vld [vmem:[#allocation7 + $0x60] sm:$0xff]
    %v168 = vld [vmem:[#allocation7 + $0x68] sm:$0xff]
    %v169 = vld [vmem:[#allocation7 + $0x70] sm:$0xff]
    %v170 = vld [vmem:[#allocation7 + $0x78] sm:$0xff]
    %v171 = vld [vmem:[%s4] sm:$0x1]
    %v173 = vlaneseq
    %v174 = vshrl.u32 %v173, 7
    %v175 = vsub.s32 0, %v174
    %v176 = vrot.slane %v171, %v175
    %178 = vmatprep.subr.mxu0 0.0
    %179 = vmatpush1.msra.mxu0 %v155
    %180 = vmatprep.subr.mxu0 0.0
    %181 = vmatpush1.msra.mxu0 %v156
    %182 = vmatprep.subr.mxu0 0.0
    %183 = vmatpush1.msra.mxu0 %v157
    %184 = vmatprep.subr.mxu0 0.0
    %185 = vmatpush1.msra.mxu0 %v158
    %186 = vmatprep.subr.mxu0 0.0
    %187 = vmatpush1.msra.mxu0 %v159
    %188 = vmatprep.subr.mxu0 0.0
    %189 = vmatpush1.msra.mxu0 %v160
    %190 = vmatprep.subr.mxu0 0.0
    %191 = vmatpush1.msra.mxu0 %v161
    %192 = vmatprep.subr.mxu0 0.0
    %193 = vmatpush1.msra.mxu0 %v162
    %194 = vmatprep.subr.mxu0 0.0
    %195 = vmatpush1.msra.mxu0 %v163
    %196 = vmatprep.subr.mxu0 0.0
    %197 = vmatpush1.msra.mxu0 %v164
    %198 = vmatprep.subr.mxu0 0.0
    %199 = vmatpush1.msra.mxu0 %v165
    %200 = vmatprep.subr.mxu0 0.0
    %201 = vmatpush1.msra.mxu0 %v166
    %202 = vmatprep.subr.mxu0 0.0
    %203 = vmatpush1.msra.mxu0 %v167
    %204 = vmatprep.subr.mxu0 0.0
    %205 = vmatpush1.msra.mxu0 %v168
    %206 = vmatprep.subr.mxu0 0.0
    %207 = vmatpush1.msra.mxu0 %v169
    %208 = vmatprep.subr.mxu0 0.0
    %209 = vmatpush1.msra.mxu0 %v170
    %210 = vmatprep.subr.mxu0 0.0
    %211 = vmatpush1.msra.mxu0 0.0
    %212 = vmatprep.subr.mxu0 0.0
    %213 = vmatpush1.msra.mxu0 0.0
    %214 = vmatprep.subr.mxu0 0.0
    %215 = vmatpush1.msra.mxu0 0.0
    %216 = vmatprep.subr.mxu0 0.0
    %217 = vmatpush1.msra.mxu0 0.0
    %218 = vmatprep.subr.mxu0 0.0
    %219 = vmatpush1.msra.mxu0 0.0
    %220 = vmatprep.subr.mxu0 0.0
    %221 = vmatpush1.msra.mxu0 0.0
    %222 = vmatprep.subr.mxu0 0.0
    %223 = vmatpush1.msra.mxu0 0.0
    %224 = vmatprep.subr.mxu0 0.0
    %225 = vmatpush1.msra.mxu0 0.0
    %226 = vmatprep.subr.mxu0 0.0
    %227 = vmatpush1.msra.mxu0 0.0
    %228 = vmatprep.subr.mxu0 0.0
    %229 = vmatpush1.msra.mxu0 0.0
    %230 = vmatprep.subr.mxu0 0.0
    %231 = vmatpush1.msra.mxu0 0.0
    %232 = vmatprep.subr.mxu0 0.0
    %233 = vmatpush1.msra.mxu0 0.0
    %234 = vmatprep.subr.mxu0 0.0
    %235 = vmatpush1.msra.mxu0 0.0
    %236 = vmatprep.subr.mxu0 0.0
    %237 = vmatpush1.msra.mxu0 0.0
    %238 = vmatprep.subr.mxu0 0.0
    %239 = vmatpush1.msra.mxu0 0.0
    %240 = vmatprep.subr.mxu0 0.0
    %241 = vmatpush1.msra.mxu0 0.0
    %242 = vmatprep.mubr.f32.mxu0 0.0
    %243 = vmatmul.mubr.f32.gmra.mrb[0].mxu0 %v153
    %v244 = vpop.f32.mrb[0].mxu0
    %v245 = vadd.f32 %v176, %v244
    %v246 = vpop.f32.mrb[0].mxu0
    %247 = vdwg.mxu0
    %v248 = vmul.f32 %v245, %v245
    %249 = vadd.xlane.f32.xlu0 %v248
    %v250 = vpop.xlane.xlu0 %249
    %v251 = vmax.f32 %v250, 1e-24
    %v252 = vrsqrt.pop %v251
    %v253 = vmul.f32 %v245, %v252
    %254 = vst [vmem:[#allocation9] sm:$0xff] %v253
    // Predicated region
    $region34: #{tpu_custom_call.1} parent=1 // pred_check
      _
    $region35: #{tpu_custom_call.1} parent=1 // pred_check_branch
      %256 = sbr.rel (0) target = $region37
    $region36: #{tpu_custom_call.1} parent=1 // pred_region
      %s258 = ssub.s32 128, 128
      %259 = vsyncadd [#allocation4], %s258
      %s261 = sshll.u32 [#allocation8], 4
      %s262 = int_to_ptr.vmem [resolvable:$true] %s261
      %264 = dma.vmem_to_hbm [thread:$0]  %s262, 128, %s5, [#allocation4]
    $region37: #{tpu_custom_call.1} parent=1 // pred_fallthru
      _
    // Predicated region
    $region38: #{tpu_custom_call.1} parent=1 // pred_check
      _
    $region39: #{tpu_custom_call.1} parent=1 // pred_check_branch
      %266 = sbr.rel (0) target = $region41
    $region40: #{tpu_custom_call.1} parent=1 // pred_region
      %s268 = ssub.s32 128, 128
      %269 = vsyncadd [#allocation10], %s268
      %s271 = sshll.u32 [#allocation9], 4
      %s272 = int_to_ptr.vmem [resolvable:$true] %s271
      %274 = dma.vmem_to_hbm [thread:$0]  %s272, 128, %s6, [#allocation10]
    $region41: #{tpu_custom_call.1} parent=1 // pred_fallthru
      _
    // Predicated region
    $region42: #{tpu_custom_call.1} parent=1 // pred_check
      _
    $region43: #{tpu_custom_call.1} parent=1 // pred_check_branch
      %276 = sbr.rel (0) target = $region45
    $region44: #{tpu_custom_call.1} parent=1 // pred_region
      %277 = dma.done [#allocation4], 128
    $region45: #{tpu_custom_call.1} parent=1 // pred_fallthru
      _
    // Predicated region
    $region46: #{tpu_custom_call.1} parent=1 // pred_check
      _
    $region47: #{tpu_custom_call.1} parent=1 // pred_check_branch
      %279 = sbr.rel (0) target = $region49
    $region48: #{tpu_custom_call.1} parent=1 // pred_region
      %280 = dma.done [#allocation10], 128
    $region49: #{tpu_custom_call.1} parent=1 // pred_fallthru
      _
    %281 = vsyncpa [#allocation3], 1
    %282 = vsyncpa [#allocation6], 1
    %283 = vsyncpa [#allocation4], 1
    %284 = vsyncpa [#allocation10], 1

</llo_original>
